<compile_context>
chip_gen: v7x
topology: tpu7x:2x2x1
jax: 0.10.0
libtpu: 0.0.40
codegen_flags: <defaults>
</compile_context>

<pallas_src>
import jax
import jax.numpy as jnp
from jax import lax
from jax.experimental import pallas as pl
from jax.experimental.pallas import tpu as pltpu

EPS = 1e-5

_VMEM_BUDGET = 32 * 1024 * 1024   # budget for double-buffered in/out blocks + temps
_VMEM_LIMIT = 48 * 1024 * 1024    # scoped VMEM limit: safe on v7x (64 MiB physical)
_ROW_CAP = 256                    # max rows per grid step (keeps a multi-step grid)


def _adain_kernel(x_ref, wb_ref, o_ref):
    # x_ref: (row_tile, HW)   wb_ref: (BC, 2) f32, VMEM-resident   o_ref: (row_tile, HW)
    rt = x_ref.shape[0]
    row0 = pl.multiple_of(pl.program_id(0) * rt, 8)
    wb = wb_ref[pl.ds(row0, rt), :]          # (rt, 2) slice of the resident params
    w = wb[:, 0:1]
    b = wb[:, 1:2]

    x = x_ref[...].astype(jnp.float32)
    mean = jnp.mean(x, axis=-1, keepdims=True)
    centered = x - mean
    var = jnp.mean(centered * centered, axis=-1, keepdims=True)  # biased variance
    inv_std = lax.rsqrt(var + EPS)

    # Fused normalize + affine: one full-width pass over x for the output.
    scale = inv_std * w
    shift = b - mean * scale
    o_ref[...] = (x * scale + shift).astype(o_ref.dtype)


def _pick_row_tile(bc, hw, itemsize):
    """Largest sublane-aligned divisor of bc whose pipelined footprint fits VMEM."""
    sub = {4: 8, 2: 16, 1: 32}.get(itemsize, 8)   # fill packed vregs for narrow dtypes
    # Per-row footprint: (in + out) blocks double-buffered + ~2 full-width f32 temps.
    per_row = hw * (2 * 2 * itemsize + 2 * 4)
    max_rows = max(_VMEM_BUDGET // per_row, 0)
    cands = [d for d in range(sub, min(bc, _ROW_CAP) + 1, sub)
             if bc % d == 0 and d <= max_rows]
    if not cands:
        # TODO(synk): very large H*W needs an inner HW-tiled two-pass scheme
        # (accumulate sum/sumsq, then a second streaming apply pass).
        return min(sub, bc)
    multi = [d for d in cands if bc // d >= 2]    # keep >=2 steps so v7x megacore splits
    return max(multi) if multi else max(cands)


def adaptive_instance_norm_2d(x, weight, bias):
    """x: (B, C, H, W); weight, bias: (B*C,) (or anything reshapeable to that)."""
    B, C, H, W = x.shape
    BC, HW = B * C, H * W
    assert BC % 8 == 0, "B*C must be a multiple of 8 (sublane alignment)"
    assert HW % 128 == 0, "H*W must be a multiple of 128 (lane alignment)"
    # TODO(synk): general H*W (e.g. 224*224) needs a masked/padded last lane-tile path.

    itemsize = jnp.dtype(x.dtype).itemsize
    row_tile = _pick_row_tile(BC, HW, itemsize)
    assert BC % row_tile == 0

    x2d = x.reshape(BC, HW)
    # Affine params stay float32 end-to-end; one (BC, 2) array -> single resident DMA.
    wb = jnp.stack(
        [jnp.asarray(weight, jnp.float32).reshape(BC),
         jnp.asarray(bias, jnp.float32).reshape(BC)],
        axis=-1,
    )

    grid = (BC // row_tile,)

    out2d = pl.pallas_call(
        _adain_kernel,
        out_shape=jax.ShapeDtypeStruct((BC, HW), x.dtype),
        grid_spec=pltpu.PrefetchScalarGridSpec(
            num_scalar_prefetch=0,
            grid=grid,
            in_specs=[
                pl.BlockSpec((row_tile, HW), lambda i: (i, 0)),
                pl.BlockSpec((BC, 2), lambda i: (0, 0)),   # whole param vector resident
            ],
            out_specs=pl.BlockSpec((row_tile, HW), lambda i: (i, 0)),
        ),
        compiler_params=pltpu.CompilerParams(
            dimension_semantics=("parallel",),
            vmem_limit_bytes=_VMEM_LIMIT,
        ),
    )(x2d, wb)

    return out2d.reshape(B, C, H, W)


def _reference(x, weight, bias):
    B, C, H, W = x.shape
    x2d = x.reshape(B * C, H * W).astype(jnp.float32)
    mean = jnp.mean(x2d, axis=-1, keepdims=True)
    var = jnp.mean((x2d - mean) ** 2, axis=-1, keepdims=True)
    y = (x2d - mean) / jnp.sqrt(var + EPS)
    y = y * weight.reshape(-1, 1).astype(jnp.float32) + bias.reshape(-1, 1).astype(jnp.float32)
    return y.reshape(B, C, H, W).astype(x.dtype)


if __name__ == "__main__":
    B, C, H, W = 2, 4, 16, 16

    key = jax.random.PRNGKey(0)
    kx, kw, kb = jax.random.split(key, 3)

    x = jax.random.normal(kx, (B, C, H, W), dtype=jnp.float32)
    # In the original model, weight/bias are assigned externally (AdaIN style):
    # one scale/shift per (b, c) channel -> shape (B*C,).
    weight = 1.0 + 0.1 * jax.random.normal(kw, (B * C,), dtype=jnp.float32)
    bias = 0.1 * jax.random.normal(kb, (B * C,), dtype=jnp.float32)

    out = adaptive_instance_norm_2d(x, weight, bias)
    out = jax.block_until_ready(out)

    ref = _reference(x, weight, bias)
    assert out.shape == (B, C, H, W)
    assert jnp.allclose(out, ref, atol=1e-4, rtol=1e-4), "mismatch vs reference"

    print("KERNEL_OK")
</pallas_src>

<mosaic_0001>
module attributes {stable_mosaic.version = 11 : i64} {
  func.func @_adain_kernel(%arg0: i32, %arg1: memref<8x256xf32, #tpu.memory_space<vmem>>, %arg2: memref<8x2xf32, #tpu.memory_space<vmem>>, %arg3: memref<8x256xf32, #tpu.memory_space<vmem>>) attributes {dimension_semantics = [#tpu.dimension_semantics<parallel>], iteration_bounds = array<i64: 1>, scalar_prefetch = 0 : i64, scratch_operands = 0 : i64, tpu.core_type = #tpu.core_type<tc>, window_params = [{transform_indices = @transform_0, window_bounds = array<i64: 8, 256>}, {pipeline_mode = #tpu.pipeline_mode<synchronous>, transform_indices = @transform_1, window_bounds = array<i64: 8, 2>}, {transform_indices = @transform_2, window_bounds = array<i64: 8, 256>}]} {
    %c8_i32 = arith.constant 8 : i32
    %0 = arith.muli %arg0, %c8_i32 : i32
    %1 = tpu.assume_multiple %0, 8 : i32
    %2 = arith.index_cast %1 : i32 to index
    %c0 = arith.constant 0 : index
    %3 = vector.load %arg2[%2, %c0] : memref<8x2xf32, #tpu.memory_space<vmem>>, vector<8x2xf32>
    %4 = vector.extract_strided_slice %3 {offsets = [0, 0], sizes = [8, 1], strides = [1, 1]} : vector<8x2xf32> to vector<8x1xf32>
    %5 = vector.extract_strided_slice %3 {offsets = [0, 1], sizes = [8, 1], strides = [1, 1]} : vector<8x2xf32> to vector<8x1xf32>
    %c0_0 = arith.constant 0 : index
    %c0_1 = arith.constant 0 : index
    %6 = vector.load %arg1[%c0_0, %c0_1] : memref<8x256xf32, #tpu.memory_space<vmem>>, vector<8x256xf32>
    %cst = arith.constant dense<0.000000e+00> : vector<8xf32>
    %7 = vector.multi_reduction <add>, %6, %cst [1] : vector<8x256xf32> to vector<8xf32>
    %8 = vector.shape_cast %7 : vector<8xf32> to vector<8x1xf32>
    %cst_2 = arith.constant 2.560000e+02 : f32
    %9 = vector.broadcast %cst_2 : f32 to vector<8x1xf32>
    %10 = arith.divf %8, %9 : vector<8x1xf32>
    %11 = vector.broadcast %10 : vector<8x1xf32> to vector<8x256xf32>
    %12 = arith.subf %6, %11 : vector<8x256xf32>
    %13 = arith.mulf %12, %12 : vector<8x256xf32>
    %cst_3 = arith.constant dense<0.000000e+00> : vector<8xf32>
    %14 = vector.multi_reduction <add>, %13, %cst_3 [1] : vector<8x256xf32> to vector<8xf32>
    %15 = vector.shape_cast %14 : vector<8xf32> to vector<8x1xf32>
    %cst_4 = arith.constant 2.560000e+02 : f32
    %16 = vector.broadcast %cst_4 : f32 to vector<8x1xf32>
    %17 = arith.divf %15, %16 : vector<8x1xf32>
    %cst_5 = arith.constant 9.99999974E-6 : f32
    %18 = vector.broadcast %cst_5 : f32 to vector<8x1xf32>
    %19 = arith.addf %17, %18 : vector<8x1xf32>
    %20 = math.rsqrt %19 : vector<8x1xf32>
    %21 = arith.mulf %20, %4 : vector<8x1xf32>
    %22 = arith.mulf %10, %21 : vector<8x1xf32>
    %23 = arith.subf %5, %22 : vector<8x1xf32>
    %24 = vector.broadcast %21 : vector<8x1xf32> to vector<8x256xf32>
    %25 = arith.mulf %6, %24 : vector<8x256xf32>
    %26 = vector.broadcast %23 : vector<8x1xf32> to vector<8x256xf32>
    %27 = arith.addf %25, %26 : vector<8x256xf32>
    %c0_6 = arith.constant 0 : index
    %c0_7 = arith.constant 0 : index
    %28 = vector.load %arg3[%c0_6, %c0_7] : memref<8x256xf32, #tpu.memory_space<vmem>>, vector<8x256xf32>
    tpu.vector_store %arg3[%c0_6, %c0_7], %27 {strides = array<i32>} : memref<8x256xf32, #tpu.memory_space<vmem>>, vector<8x256xf32>,
    return
  }
  func.func @transform_0(%arg0: i32) -> (i32, i32) {
    %c0_i32 = arith.constant 0 : i32
    %c0_i32_0 = arith.constant 0 : i32
    return %arg0, %c0_i32 : i32, i32
  }
  func.func @transform_1(%arg0: i32) -> (i32, i32) {
    %c0_i32 = arith.constant 0 : i32
    %c0_i32_0 = arith.constant 0 : i32
    %c0_i32_1 = arith.constant 0 : i32
    return %c0_i32, %c0_i32_0 : i32, i32
  }
  func.func @transform_2(%arg0: i32) -> (i32, i32) {
    %c0_i32 = arith.constant 0 : i32
    %c0_i32_0 = arith.constant 0 : i32
    return %arg0, %c0_i32 : i32, i32
  }
}

</mosaic_0001>

<llo_original>
// kernel: tpu_custom_call.1
$region0: #{tpu_custom_call.1}
  #allocation0 [shape = 'u32[]', space=smem, size = 0x4, offset = 0x4, fixed_abs, tag = 'smem constant byte address 0x4 - core index']
  #allocation1 [shape = 'u32[144,128]{1,0:T(1,128)}', space=vmem, size = 0x12000, scoped, tag = 'internal scratch']
  %s0 = inlined_call_operand.hbm [shape: f32[8,256], index: 0, kind: input, shape index: {}]
  %s1 = inlined_call_operand.vmem [shape: f32[8,2], index: 1, kind: input, shape index: {}]
  %s2 = inlined_call_operand.hbm [shape: f32[8,256], index: 2, kind: output, shape index: {}]
  %s3 = sld [smem:[#allocation0]]
  $region22: #{tpu_custom_call.1} parent=0
    _
  %s5 = ssub.s32 1, %s3
  %s6 = scalar_select 0, %s5, %s3
  $region1: #{tpu_custom_call.1} parent=0
    #allocation2 [shape = 'u8[8192]{0}', space=vmem, size = 0x2000, scoped, tag = 'input window, operand 0, single buffered']
    #allocation3 [shape = 's32[1]{0}', space=sflag, size = 0x4, scoped, tag = 'scoped memory for tpu_custom_call.1']
    #allocation4 [shape = 's32[1]{0}', space=sflag, size = 0x4, scoped, tag = 'scoped memory for tpu_custom_call.1']
    #allocation5 [shape = 'u8[8192]{0}', space=vmem, size = 0x2000, scoped, tag = 'output window, operand 0, single buffered']
    %7 = vsyncpa [#allocation3], 0
    %8 = vsyncpa [#allocation4], 0
    // Predicated region
    $region2: #{tpu_custom_call.1} parent=1 // pred_check
      _
    $region3: #{tpu_custom_call.1} parent=1 // pred_check_branch
      %10 = sbr.rel (0) target = $region5
    $region4: #{tpu_custom_call.1} parent=1 // pred_region
      %s12 = ssub.s32 256, 256
      %13 = vsyncadd [#allocation3], %s12
      %s15 = sshll.u32 [#allocation2], 4
      %s16 = int_to_ptr.vmem [resolvable:$true] %s15
      %18 = dma.hbm_to_vmem [thread:$0]  %s0, 256, %s16, [#allocation3]
    $region5: #{tpu_custom_call.1} parent=1 // pred_fallthru
      _
    // Predicated region
    $region6: #{tpu_custom_call.1} parent=1 // pred_check
      _
    $region7: #{tpu_custom_call.1} parent=1 // pred_check_branch
      %20 = sbr.rel (0) target = $region9
    $region8: #{tpu_custom_call.1} parent=1 // pred_region
      _
    $region9: #{tpu_custom_call.1} parent=1 // pred_fallthru
      _
    // Predicated region
    $region10: #{tpu_custom_call.1} parent=1 // pred_check
      _
    $region11: #{tpu_custom_call.1} parent=1 // pred_check_branch
      %22 = sbr.rel (0) target = $region13
    $region12: #{tpu_custom_call.1} parent=1 // pred_region
      %23 = dma.done [#allocation3], 256
    $region13: #{tpu_custom_call.1} parent=1 // pred_fallthru
      _
    %s24 = smul.u32 0, 8
    %s25 = scalar_lea.vmem %s1, %s24
    %v26 = vld [vmem:[%s25] sm:$0xff]
    %v27 = vld [vmem:[#allocation2] sm:$0xff]
    %v28 = vld [vmem:[#allocation2 + $0x8] sm:$0xff]
    %v29 = vadd.f32 %v27, %v28
    %30 = vadd.xlane.f32.xlu0 %v29
    %v31 = vpop.xlane.xlu0 %30
    %v32 = vrcp.pop 256.0
    %v33 = vmul.f32 %v31, %v32
    %v34 = vsub.f32 %v27, %v33
    %v35 = vsub.f32 %v28, %v33
    %v36 = vmul.f32 %v34, %v34
    %v37 = vmul.f32 %v35, %v35
    %v38 = vadd.f32 %v36, %v37
    %39 = vadd.xlane.f32.xlu0 %v38
    %v40 = vpop.xlane.xlu0 %39
    %v41 = vmul.f32 %v40, %v32
    %v42 = vadd.f32 %v41, 1e-05
    %v43 = vrsqrt.pop %v42
    %v44 = vmul.f32 %v43, %v26
    %v45 = vmul.f32 %v33, %v44
    %47 = vrot.lane.b32.xlu0 %v45, 1
    %v48 = vpop.permute.xlu0 %47
    %v50 = vsub.f32 %v26, %v48
    %52 = vset.pattern.permute.xlu0 0
    %53 = vperm.xlu0 %52, %v44
    %v54 = vpop.permute.xlu0 %53
    %v56 = vmul.f32 %v27, %v54
    %v57 = vmul.f32 %v28, %v54
    %59 = vset.pattern.permute.xlu0 1
    %60 = vperm.xlu0 %59, %v50
    %v61 = vpop.permute.xlu0 %60
    %v63 = vadd.f32 %v56, %v61
    %v64 = vadd.f32 %v57, %v61
    %65 = vst [vmem:[#allocation5] sm:$0xff] %v63
    %66 = vst [vmem:[#allocation5 + $0x8] sm:$0xff] %v64
    // Predicated region
    $region14: #{tpu_custom_call.1} parent=1 // pred_check
      _
    $region15: #{tpu_custom_call.1} parent=1 // pred_check_branch
      %68 = sbr.rel (0) target = $region17
    $region16: #{tpu_custom_call.1} parent=1 // pred_region
      %s70 = ssub.s32 256, 256
      %71 = vsyncadd [#allocation4], %s70
      %s73 = sshll.u32 [#allocation5], 4
      %s74 = int_to_ptr.vmem [resolvable:$true] %s73
      %76 = dma.vmem_to_hbm [thread:$0]  %s74, 256, %s2, [#allocation4]
    $region17: #{tpu_custom_call.1} parent=1 // pred_fallthru
      _
    // Predicated region
    $region18: #{tpu_custom_call.1} parent=1 // pred_check
      _
    $region19: #{tpu_custom_call.1} parent=1 // pred_check_branch
      %78 = sbr.rel (0) target = $region21
    $region20: #{tpu_custom_call.1} parent=1 // pred_region
      %79 = dma.done [#allocation4], 256
    $region21: #{tpu_custom_call.1} parent=1 // pred_fallthru
      _
    %80 = vsyncpa [#allocation3], 1
    %81 = vsyncpa [#allocation4], 1

</llo_original>
